<compile_context>
chip_gen: v7x
topology: tpu7x:2x2x1
jax: 0.10.0
libtpu: 0.0.40
codegen_flags: <defaults>
</compile_context>

<pallas_src>
import functools

import jax
import jax.numpy as jnp
from jax.experimental import pallas as pl
from jax.experimental.pallas import tpu as pltpu


def _round_up(x, m):
    return ((x + m - 1) // m) * m


# ----------------------------------------------------------------------------
# Standalone LayerNorm kernel (generic-fn path): normalize rows over last axis.
# ----------------------------------------------------------------------------
def _layernorm_kernel(x_ref, gamma_ref, beta_ref, o_ref, *, eps):
    x = x_ref[...].astype(jnp.float32)                       # (tm, D)
    inv_d = 1.0 / x.shape[-1]
    s1 = jnp.sum(x, axis=-1, keepdims=True)
    s2 = jnp.sum(x * x, axis=-1, keepdims=True)
    mean = s1 * inv_d
    var = s2 * inv_d - mean * mean                           # biased, like PyTorch
    y = (x - mean) * jax.lax.rsqrt(var + eps)
    y = y * gamma_ref[...].astype(jnp.float32) + beta_ref[...].astype(jnp.float32)
    o_ref[...] = y.astype(o_ref.dtype)


def layernorm_pallas(x, gamma, beta, *, eps=1e-5, block_rows=512):
    """x: (R, D); gamma/beta: (D,). LayerNorm over the last axis."""
    R, D = x.shape
    tm = min(block_rows, _round_up(R, 8))
    Rp = _round_up(R, tm)
    xp = x if Rp == R else jnp.pad(x, ((0, Rp - R), (0, 0)))

    out = pl.pallas_call(
        functools.partial(_layernorm_kernel, eps=eps),
        out_shape=jax.ShapeDtypeStruct((Rp, D), x.dtype),
        grid_spec=pltpu.PrefetchScalarGridSpec(
            num_scalar_prefetch=0,
            grid=(Rp // tm,),
            in_specs=[
                pl.BlockSpec((tm, D), lambda i: (i, 0)),
                pl.BlockSpec((1, D), lambda i: (0, 0)),
                pl.BlockSpec((1, D), lambda i: (0, 0)),
            ],
            out_specs=pl.BlockSpec((tm, D), lambda i: (i, 0)),
        ),
        compiler_params=pltpu.CompilerParams(
            dimension_semantics=("parallel",),
            vmem_limit_bytes=32 * 1024 * 1024),
    )(xp, gamma.reshape(1, D), beta.reshape(1, D))
    return out[:R] if Rp != R else out


# ----------------------------------------------------------------------------
# Fused PreNorm + Linear kernel: out = LayerNorm(x) @ W + b, single pallas_call.
# Grid = (row tiles, N tiles, K tiles). LN is computed once per (row, N) tile
# at k == 0 (cheap VPU/XLU work vs the MXU matmul) and stashed in VMEM scratch
# as (num_k, tm, tk) chunks so the K loop never needs a dynamic lane slice.
# ----------------------------------------------------------------------------
def _prenorm_linear_kernel(x_ref, gamma_ref, beta_ref, w_ref, b_ref, o_ref,
                           xn_ref, acc_ref, *, eps, num_k, tk):
    k = pl.program_id(2)

    @pl.when(k == 0)
    def _():
        x = x_ref[...].astype(jnp.float32)                   # (tm, D)
        inv_d = 1.0 / x.shape[-1]
        s1 = jnp.sum(x, axis=-1, keepdims=True)
        s2 = jnp.sum(x * x, axis=-1, keepdims=True)
        mean = s1 * inv_d
        var = s2 * inv_d - mean * mean
        y = (x - mean) * jax.lax.rsqrt(var + eps)
        y = (y * gamma_ref[...].astype(jnp.float32)
             + beta_ref[...].astype(jnp.float32))
        for kk in range(num_k):                              # static unroll
            xn_ref[kk] = y[:, kk * tk:(kk + 1) * tk].astype(xn_ref.dtype)
        acc_ref[...] = jnp.zeros_like(acc_ref)

    acc_ref[...] += jnp.dot(xn_ref[k], w_ref[...],
                            preferred_element_type=jnp.float32)

    @pl.when(k == pl.num_programs(2) - 1)
    def _():
        o_ref[...] = (acc_ref[...]
                      + b_ref[...].astype(jnp.float32)).astype(o_ref.dtype)


def prenorm_linear_pallas(x, gamma, beta, w, b, *, eps=1e-5,
                          block_rows=256, block_n=512, block_k=512,
                          compute_dtype=None):
    """x: (R, D), w: (D, H), b: (H,) -> LayerNorm(x) @ w + b, shape (R, H)."""
    R, D = x.shape
    Dw, H = w.shape
    assert Dw == D
    compute_dtype = compute_dtype if compute_dtype is not None else w.dtype

    # --- N tiling: lane-dense output (pad H to a multiple of 128). ---
    Hp = _round_up(H, 128)
    tn = min(_round_up(min(block_n, Hp), 128), Hp)
    while Hp % tn:
        tn -= 128

    # --- K tiling: full D unless it is large and cleanly 128-divisible. ---
    if D <= block_k or D % 128 != 0:
        tk = D
    else:
        tk = block_k
        while D % tk:
            tk -= 128
    num_k = D // tk

    # --- Row tiling with a conservative VMEM budget (v7x-safe). ---
    tm = min(block_rows, _round_up(R, 8))
    x_b = jnp.dtype(x.dtype).itemsize
    w_b = jnp.dtype(w.dtype).itemsize
    c_b = jnp.dtype(compute_dtype).itemsize

    def vmem_bytes(tm_):
        return (2 * tm_ * D * x_b          # x tile, double-buffered
                + 2 * tk * tn * w_b        # weight tile, double-buffered
                + 2 * tm_ * tn * x_b       # output tile, double-buffered
                + num_k * tm_ * tk * c_b   # normalized-x scratch
                + tm_ * tn * 4)            # f32 accumulator scratch

    budget = 24 * 1024 * 1024
    while tm > 8 and vmem_bytes(tm) > budget:
        tm = max(8, tm // 2)
    Rp = _round_up(R, tm)

    # --- Padding (rows with zeros; padded rows are discarded at the end). ---
    xp = x if Rp == R else jnp.pad(x, ((0, Rp - R), (0, 0)))
    wp = w if Hp == H else jnp.pad(w, ((0, 0), (0, Hp - H)))
    bp = b if Hp == H else jnp.pad(b, (0, Hp - H))

    out = pl.pallas_call(
        functools.partial(_prenorm_linear_kernel, eps=eps, num_k=num_k, tk=tk),
        out_shape=jax.ShapeDtypeStruct((Rp, Hp), x.dtype),
        grid_spec=pltpu.PrefetchScalarGridSpec(
            num_scalar_prefetch=0,
            grid=(Rp // tm, Hp // tn, num_k),
            in_specs=[
                pl.BlockSpec((tm, D), lambda i, j, k: (i, 0)),   # x
                pl.BlockSpec((1, D), lambda i, j, k: (0, 0)),    # gamma
                pl.BlockSpec((1, D), lambda i, j, k: (0, 0)),    # beta
                pl.BlockSpec((tk, tn), lambda i, j, k: (k, j)),  # w
                pl.BlockSpec((1, tn), lambda i, j, k: (0, j)),   # b
            ],
            out_specs=pl.BlockSpec((tm, tn), lambda i, j, k: (i, j)),
            scratch_shapes=[
                pltpu.VMEM((num_k, tm, tk), compute_dtype),      # normalized x
                pltpu.VMEM((tm, tn), jnp.float32),               # accumulator
            ],
        ),
        compiler_params=pltpu.CompilerParams(
            dimension_semantics=("parallel", "parallel", "arbitrary"),
            vmem_limit_bytes=32 * 1024 * 1024),
    )(xp, gamma.reshape(1, D), beta.reshape(1, D), wp, bp.reshape(1, Hp))

    if Rp != R or Hp != H:
        out = out[:R, :H]
    return out


# ----------------------------------------------------------------------------
# PreNorm: y = fn(LayerNorm(x), **kwargs)
# ----------------------------------------------------------------------------
class LinearPallas:
    """Example `fn`: Linear(dim -> hidden). Fused with the LN when used in PreNorm."""

    def __init__(self, w, b):
        self.w = w          # (D, H)
        self.b = b          # (H,)

    def __call__(self, y, **kwargs):
        lead = y.shape[:-1]
        R = 1
        for s in lead:
            R *= s
        D = y.shape[-1]
        # Standalone path (LN already applied): identity gamma/beta would be
        # wrong, so just do the matmul via the fused kernel with eps-free LN?
        # TODO(synk): standalone LinearPallas path reuses jnp.dot; the fused
        # PreNorm path below is the optimized kernel.
        out = jnp.dot(y.reshape(R, D), self.w) + self.b
        return out.reshape(*lead, self.w.shape[1])


class PreNormPallas:
    def __init__(self, dim, fn, *, eps=1e-5):
        self.dim = dim
        self.fn = fn
        self.eps = eps
        # nn.LayerNorm default init: weight=1, bias=0
        self.gamma = jnp.ones((dim,), jnp.float32)
        self.beta = jnp.zeros((dim,), jnp.float32)

    def __call__(self, x, **kwargs):
        orig_shape = x.shape
        R = 1
        for s in orig_shape[:-1]:
            R *= s
        x2 = x.reshape(R, self.dim)

        if isinstance(self.fn, LinearPallas):
            # Fused LayerNorm + Linear: no HBM round-trip for the normalized x.
            out2 = prenorm_linear_pallas(x2, self.gamma, self.beta,
                                         self.fn.w, self.fn.b, eps=self.eps)
            return out2.reshape(*orig_shape[:-1], self.fn.w.shape[1])

        # Generic fn: standalone LayerNorm kernel, then arbitrary fn.
        normed = layernorm_pallas(x2, self.gamma, self.beta, eps=self.eps)
        return self.fn(normed.reshape(orig_shape), **kwargs)


if __name__ == "__main__":
    key = jax.random.PRNGKey(0)
    B, N, D, H = 2, 8, 32, 64  # batch, seq, dim, hidden

    k_x, k_w, k_b = jax.random.split(key, 3)
    x = jax.random.normal(k_x, (B, N, D), jnp.float32)
    w = (jax.random.normal(k_w, (D, H), jnp.float32) / jnp.sqrt(D)).astype(jnp.float32)
    b = jax.random.normal(k_b, (H,), jnp.float32) * 0.01

    # Fused PreNorm(LayerNorm -> Linear) path.
    prenorm = PreNormPallas(D, LinearPallas(w, b))
    out = jax.block_until_ready(prenorm(x))

    # Reference in plain JAX (matches PyTorch LayerNorm semantics).
    mean = jnp.mean(x, axis=-1, keepdims=True)
    var = jnp.mean((x - mean) ** 2, axis=-1, keepdims=True)
    normed_ref = (x - mean) * jax.lax.rsqrt(var + 1e-5)
    ref = jnp.einsum("bnd,dh->bnh", normed_ref, w) + b
    assert out.shape == (B, N, H)
    assert jnp.allclose(out, ref, atol=2e-3, rtol=2e-3), "fused PreNorm mismatch"

    # Generic-fn path (standalone LayerNorm kernel + identity fn).
    prenorm_id = PreNormPallas(D, lambda y: y)
    normed = jax.block_until_ready(prenorm_id(x))
    assert normed.shape == x.shape
    assert jnp.allclose(normed, normed_ref, atol=2e-3, rtol=2e-3), "LN mismatch"

    print("KERNEL_OK")
</pallas_src>

<mosaic_0001>
module attributes {stable_mosaic.version = 11 : i64} {
  func.func @_prenorm_linear_kernel(%arg0: i32, %arg1: i32, %arg2: i32, %arg3: memref<16x32xf32, #tpu.memory_space<vmem>>, %arg4: memref<1x32xf32, #tpu.memory_space<vmem>>, %arg5: memref<1x32xf32, #tpu.memory_space<vmem>>, %arg6: memref<32x128xf32, #tpu.memory_space<vmem>>, %arg7: memref<1x128xf32, #tpu.memory_space<vmem>>, %arg8: memref<16x128xf32, #tpu.memory_space<vmem>>, %arg9: memref<1x16x32xf32, #tpu.memory_space<vmem>>, %arg10: memref<16x128xf32, #tpu.memory_space<vmem>>) attributes {dimension_semantics = [#tpu.dimension_semantics<parallel>, #tpu.dimension_semantics<parallel>, #tpu.dimension_semantics<arbitrary>], iteration_bounds = array<i64: 1, 1, 1>, scalar_prefetch = 0 : i64, scratch_operands = 2 : i64, tpu.core_type = #tpu.core_type<tc>, window_params = [{transform_indices = @transform_0, window_bounds = array<i64: 16, 32>}, {pipeline_mode = #tpu.pipeline_mode<synchronous>, transform_indices = @transform_1, window_bounds = array<i64: 1, 32>}, {pipeline_mode = #tpu.pipeline_mode<synchronous>, transform_indices = @transform_2, window_bounds = array<i64: 1, 32>}, {transform_indices = @transform_3, window_bounds = array<i64: 32, 128>}, {transform_indices = @transform_4, window_bounds = array<i64: 1, 128>}, {transform_indices = @transform_5, window_bounds = array<i64: 16, 128>}]} {
    %c0_i32 = arith.constant 0 : i32
    %0 = arith.cmpi eq, %arg2, %c0_i32 : i32
    %1 = arith.extui %0 : i1 to i32
    %c0_i32_0 = arith.constant 0 : i32
    %2 = arith.cmpi ne, %1, %c0_i32_0 : i32
    scf.if %2 {
      %c0_10 = arith.constant 0 : index
      %c0_11 = arith.constant 0 : index
      %14 = vector.load %arg3[%c0_10, %c0_11] : memref<16x32xf32, #tpu.memory_space<vmem>>, vector<16x32xf32>
      %cst_12 = arith.constant dense<0.000000e+00> : vector<16xf32>
      %15 = vector.multi_reduction <add>, %14, %cst_12 [1] : vector<16x32xf32> to vector<16xf32>
      %16 = vector.shape_cast %15 : vector<16xf32> to vector<16x1xf32>
      %17 = arith.mulf %14, %14 : vector<16x32xf32>
      %cst_13 = arith.constant dense<0.000000e+00> : vector<16xf32>
      %18 = vector.multi_reduction <add>, %17, %cst_13 [1] : vector<16x32xf32> to vector<16xf32>
      %19 = vector.shape_cast %18 : vector<16xf32> to vector<16x1xf32>
      %cst_14 = arith.constant 3.125000e-02 : f32
      %20 = vector.broadcast %cst_14 : f32 to vector<16x1xf32>
      %21 = arith.mulf %16, %20 : vector<16x1xf32>
      %cst_15 = arith.constant 3.125000e-02 : f32
      %22 = vector.broadcast %cst_15 : f32 to vector<16x1xf32>
      %23 = arith.mulf %19, %22 : vector<16x1xf32>
      %24 = arith.mulf %21, %21 : vector<16x1xf32>
      %25 = arith.subf %23, %24 : vector<16x1xf32>
      %26 = vector.broadcast %21 : vector<16x1xf32> to vector<16x32xf32>
      %27 = arith.subf %14, %26 : vector<16x32xf32>
      %cst_16 = arith.constant 9.99999974E-6 : f32
      %28 = vector.broadcast %cst_16 : f32 to vector<16x1xf32>
      %29 = arith.addf %25, %28 : vector<16x1xf32>
      %30 = math.rsqrt %29 : vector<16x1xf32>
      %31 = vector.broadcast %30 : vector<16x1xf32> to vector<16x32xf32>
      %32 = arith.mulf %27, %31 : vector<16x32xf32>
      %c0_17 = arith.constant 0 : index
      %c0_18 = arith.constant 0 : index
      %33 = vector.load %arg4[%c0_17, %c0_18] : memref<1x32xf32, #tpu.memory_space<vmem>>, vector<1x32xf32>
      %34 = vector.broadcast %33 : vector<1x32xf32> to vector<16x32xf32>
      %35 = arith.mulf %32, %34 : vector<16x32xf32>
      %c0_19 = arith.constant 0 : index
      %c0_20 = arith.constant 0 : index
      %36 = vector.load %arg5[%c0_19, %c0_20] : memref<1x32xf32, #tpu.memory_space<vmem>>, vector<1x32xf32>
      %37 = vector.broadcast %36 : vector<1x32xf32> to vector<16x32xf32>
      %38 = arith.addf %35, %37 : vector<16x32xf32>
      %c0_21 = arith.constant 0 : index
      %c0_22 = arith.constant 0 : index
      %c0_23 = arith.constant 0 : index
      %39 = vector.load %arg9[%c0_21, %c0_22, %c0_23] : memref<1x16x32xf32, #tpu.memory_space<vmem>>, vector<1x16x32xf32>
      %40 = vector.shape_cast %39 : vector<1x16x32xf32> to vector<16x32xf32>
      %41 = vector.shape_cast %38 : vector<16x32xf32> to vector<1x16x32xf32>
      tpu.vector_store %arg9[%c0_21, %c0_22, %c0_23], %41 {strides = array<i32>} : memref<1x16x32xf32, #tpu.memory_space<vmem>>, vector<1x16x32xf32>,
      %cst_24 = arith.constant 0.000000e+00 : f32
      %42 = vector.broadcast %cst_24 : f32 to vector<16x128xf32>
      %c0_25 = arith.constant 0 : index
      %c0_26 = arith.constant 0 : index
      %43 = vector.load %arg10[%c0_25, %c0_26] : memref<16x128xf32, #tpu.memory_space<vmem>>, vector<16x128xf32>
      tpu.vector_store %arg10[%c0_25, %c0_26], %42 {strides = array<i32>} : memref<16x128xf32, #tpu.memory_space<vmem>>, vector<16x128xf32>,
    } else {
    }
    %c0 = arith.constant 0 : index
    %c0_1 = arith.constant 0 : index
    %3 = vector.load %arg10[%c0, %c0_1] : memref<16x128xf32, #tpu.memory_space<vmem>>, vector<16x128xf32>
    %4 = arith.index_cast %arg2 : i32 to index
    %c0_2 = arith.constant 0 : index
    %c0_3 = arith.constant 0 : index
    %5 = vector.load %arg9[%4, %c0_2, %c0_3] : memref<1x16x32xf32, #tpu.memory_space<vmem>>, vector<1x16x32xf32>
    %6 = vector.shape_cast %5 : vector<1x16x32xf32> to vector<16x32xf32>
    %c0_4 = arith.constant 0 : index
    %c0_5 = arith.constant 0 : index
    %7 = vector.load %arg6[%c0_4, %c0_5] : memref<32x128xf32, #tpu.memory_space<vmem>>, vector<32x128xf32>
    %cst = arith.constant dense<0.000000e+00> : vector<16x128xf32>
    %8 = tpu.matmul %6, %7, %cst {dimension_numbers = #tpu.dot_dimension_numbers<[1], [0], [0], [1], [0, 0, 1, 1], [], []>} : vector<16x32xf32>, vector<32x128xf32>, vector<16x128xf32> -> vector<16x128xf32>
    %9 = arith.addf %3, %8 : vector<16x128xf32>
    %c0_6 = arith.constant 0 : index
    %c0_7 = arith.constant 0 : index
    %10 = vector.load %arg10[%c0_6, %c0_7] : memref<16x128xf32, #tpu.memory_space<vmem>>, vector<16x128xf32>
    tpu.vector_store %arg10[%c0_6, %c0_7], %9 {strides = array<i32>} : memref<16x128xf32, #tpu.memory_space<vmem>>, vector<16x128xf32>,
    %c0_i32_8 = arith.constant 0 : i32
    %11 = arith.cmpi eq, %arg2, %c0_i32_8 : i32
    %12 = arith.extui %11 : i1 to i32
    %c0_i32_9 = arith.constant 0 : i32
    %13 = arith.cmpi ne, %12, %c0_i32_9 : i32
    scf.if %13 {
      %c0_10 = arith.constant 0 : index
      %c0_11 = arith.constant 0 : index
      %14 = vector.load %arg10[%c0_10, %c0_11] : memref<16x128xf32, #tpu.memory_space<vmem>>, vector<16x128xf32>
      %c0_12 = arith.constant 0 : index
      %c0_13 = arith.constant 0 : index
      %15 = vector.load %arg7[%c0_12, %c0_13] : memref<1x128xf32, #tpu.memory_space<vmem>>, vector<1x128xf32>
      %16 = vector.broadcast %15 : vector<1x128xf32> to vector<16x128xf32>
      %17 = arith.addf %14, %16 : vector<16x128xf32>
      %c0_14 = arith.constant 0 : index
      %c0_15 = arith.constant 0 : index
      %18 = vector.load %arg8[%c0_14, %c0_15] : memref<16x128xf32, #tpu.memory_space<vmem>>, vector<16x128xf32>
      tpu.vector_store %arg8[%c0_14, %c0_15], %17 {strides = array<i32>} : memref<16x128xf32, #tpu.memory_space<vmem>>, vector<16x128xf32>,
    } else {
    }
    return
  }
  func.func @transform_0(%arg0: i32, %arg1: i32, %arg2: i32) -> (i32, i32) {
    %c0_i32 = arith.constant 0 : i32
    %c0_i32_0 = arith.constant 0 : i32
    return %arg0, %c0_i32 : i32, i32
  }
  func.func @transform_1(%arg0: i32, %arg1: i32, %arg2: i32) -> (i32, i32) {
    %c0_i32 = arith.constant 0 : i32
    %c0_i32_0 = arith.constant 0 : i32
    %c0_i32_1 = arith.constant 0 : i32
    return %c0_i32, %c0_i32_0 : i32, i32
  }
  func.func @transform_2(%arg0: i32, %arg1: i32, %arg2: i32) -> (i32, i32) {
    %c0_i32 = arith.constant 0 : i32
    %c0_i32_0 = arith.constant 0 : i32
    %c0_i32_1 = arith.constant 0 : i32
    return %c0_i32, %c0_i32_0 : i32, i32
  }
  func.func @transform_3(%arg0: i32, %arg1: i32, %arg2: i32) -> (i32, i32) {
    %c0_i32 = arith.constant 0 : i32
    return %arg2, %arg1 : i32, i32
  }
  func.func @transform_4(%arg0: i32, %arg1: i32, %arg2: i32) -> (i32, i32) {
    %c0_i32 = arith.constant 0 : i32
    %c0_i32_0 = arith.constant 0 : i32
    return %c0_i32, %arg1 : i32, i32
  }
  func.func @transform_5(%arg0: i32, %arg1: i32, %arg2: i32) -> (i32, i32) {
    %c0_i32 = arith.constant 0 : i32
    return %arg0, %arg1 : i32, i32
  }
}

</mosaic_0001>

<llo_original>
// kernel: tpu_custom_call.1
$region0: #{tpu_custom_call.1}
  #allocation0 [shape = 'u32[]', space=smem, size = 0x4, offset = 0x4, fixed_abs, tag = 'smem constant byte address 0x4 - core index']
  #allocation1 [shape = 'u32[144,128]{1,0:T(1,128)}', space=vmem, size = 0x12000, scoped, tag = 'internal scratch']
  #allocation2 [shape = 'f32[1,16,32]{2,1,0:T(8,128)}', space=vmem, size = 0x2000, scoped, tag = 'scratch operand']
  #allocation3 [shape = 'f32[16,128]{1,0:T(8,128)}', space=vmem, size = 0x2000, scoped, tag = 'scratch operand']
  %s0 = inlined_call_operand.hbm [shape: f32[16,32], index: 0, kind: input, shape index: {}]
  %s1 = inlined_call_operand.vmem [shape: f32[1,32], index: 1, kind: input, shape index: {}]
  %s2 = inlined_call_operand.vmem [shape: f32[1,32], index: 2, kind: input, shape index: {}]
  %s3 = inlined_call_operand.hbm [shape: f32[32,128], index: 3, kind: input, shape index: {}]
  %s4 = inlined_call_operand.vmem [shape: f32[1,128], index: 4, kind: input, shape index: {}]
  %s5 = inlined_call_operand.hbm [shape: f32[16,128], index: 5, kind: output, shape index: {}]
  %s6 = sld [smem:[#allocation0]]
  $region46: #{tpu_custom_call.1} parent=0
    _
  %s8 = ssub.s32 1, %s6
  %s9 = scalar_select 0, %s8, %s6
  $region1: #{tpu_custom_call.1} parent=0
    #allocation4 [shape = 'u8[8192]{0}', space=vmem, size = 0x2000, scoped, tag = 'input window, operand 0, single buffered']
    #allocation5 [shape = 's32[1]{0}', space=sflag, size = 0x4, scoped, tag = 'scoped memory for tpu_custom_call.1']
    #allocation6 [shape = 's32[1]{0}', space=sflag, size = 0x4, scoped, tag = 'scoped memory for tpu_custom_call.1']
    #allocation7 [shape = 'u8[16384]{0}', space=vmem, size = 0x4000, scoped, tag = 'input window, operand 3, single buffered']
    #allocation8 [shape = 's32[1]{0}', space=sflag, size = 0x4, scoped, tag = 'scoped memory for tpu_custom_call.1']
    #allocation9 [shape = 'u8[8192]{0}', space=vmem, size = 0x2000, scoped, tag = 'output window, operand 0, single buffered']
    %10 = vsyncpa [#allocation5], 0
    %11 = vsyncpa [#allocation8], 0
    %12 = vsyncpa [#allocation6], 0
    // Predicated region
    $region2: #{tpu_custom_call.1} parent=1 // pred_check
      _
    $region3: #{tpu_custom_call.1} parent=1 // pred_check_branch
      %14 = sbr.rel (0) target = $region5
    $region4: #{tpu_custom_call.1} parent=1 // pred_region
      %s16 = ssub.s32 256, 256
      %17 = vsyncadd [#allocation5], %s16
      %s18 = sshll.u32 [#allocation4], 4
      %s19 = int_to_ptr.vmem [resolvable:$true] %s18
      %24 = dma.hbm_to_vmem [thread:$0]  %s0, 256, %s19, [#allocation5], 128, 128, 8
    $region5: #{tpu_custom_call.1} parent=1 // pred_fallthru
      _
    // Predicated region
    $region6: #{tpu_custom_call.1} parent=1 // pred_check
      _
    $region7: #{tpu_custom_call.1} parent=1 // pred_check_branch
      %26 = sbr.rel (0) target = $region9
    $region8: #{tpu_custom_call.1} parent=1 // pred_region
      _
    $region9: #{tpu_custom_call.1} parent=1 // pred_fallthru
      _
    // Predicated region
    $region10: #{tpu_custom_call.1} parent=1 // pred_check
      _
    $region11: #{tpu_custom_call.1} parent=1 // pred_check_branch
      %28 = sbr.rel (0) target = $region13
    $region12: #{tpu_custom_call.1} parent=1 // pred_region
      _
    $region13: #{tpu_custom_call.1} parent=1 // pred_fallthru
      _
    // Predicated region
    $region14: #{tpu_custom_call.1} parent=1 // pred_check
      _
    $region15: #{tpu_custom_call.1} parent=1 // pred_check_branch
      %30 = sbr.rel (0) target = $region17
    $region16: #{tpu_custom_call.1} parent=1 // pred_region
      %s32 = ssub.s32 512, 512
      %33 = vsyncadd [#allocation8], %s32
      %s34 = sshll.u32 [#allocation7], 4
      %s35 = int_to_ptr.vmem [resolvable:$true] %s34
      %40 = dma.hbm_to_vmem [thread:$0]  %s3, 512, %s35, [#allocation8], 128, 128, 8
    $region17: #{tpu_custom_call.1} parent=1 // pred_fallthru
      _
    // Predicated region
    $region18: #{tpu_custom_call.1} parent=1 // pred_check
      _
    $region19: #{tpu_custom_call.1} parent=1 // pred_check_branch
      %42 = sbr.rel (0) target = $region21
    $region20: #{tpu_custom_call.1} parent=1 // pred_region
      _
    $region21: #{tpu_custom_call.1} parent=1 // pred_fallthru
      _
    // Predicated region
    $region22: #{tpu_custom_call.1} parent=1 // pred_check
      _
    $region23: #{tpu_custom_call.1} parent=1 // pred_check_branch
      %44 = sbr.rel (0) target = $region25
    $region24: #{tpu_custom_call.1} parent=1 // pred_region
      %45 = dma.done [#allocation5], 256
    $region25: #{tpu_custom_call.1} parent=1 // pred_fallthru
      _
    // Predicated region
    $region26: #{tpu_custom_call.1} parent=1 // pred_check
      _
    $region27: #{tpu_custom_call.1} parent=1 // pred_check_branch
      %47 = sbr.rel (0) target = $region29
    $region28: #{tpu_custom_call.1} parent=1 // pred_region
      %48 = dma.done [#allocation8], 512
    $region29: #{tpu_custom_call.1} parent=1 // pred_fallthru
      _
    %p49 = scmp.eq.s32.totalorder 0, 0
    // Predicated region
    $region30: #{tpu_custom_call.1} parent=1 // pred_check
      %p50 = pneg %p49
    $region31: #{tpu_custom_call.1} parent=1 // pred_check_branch
      %52 = sbr.rel (%p50) target = $region33
    $region32: #{tpu_custom_call.1} parent=1 // pred_region
      %v53 = vld [vmem:[#allocation4] sm:$0xff]
      %v54 = vld [vmem:[#allocation4 + $0x8] sm:$0xff]
      %vm55 = vcmask 261120
      %v56 = vsel %vm55, %v53, 0.0
      %57 = vadd.xlane.f32.xlu0 %v56
      %v58 = vpop.xlane.xlu0 %57
      %v59 = vsel %vm55, %v54, 0.0
      %60 = vadd.xlane.f32.xlu0 %v59
      %v61 = vpop.xlane.xlu0 %60
      %v62 = vmul.f32 %v53, %v53
      %v63 = vmul.f32 %v54, %v54
      %v64 = vsel %vm55, %v62, 0.0
      %65 = vadd.xlane.f32.xlu0 %v64
      %v66 = vpop.xlane.xlu0 %65
      %v67 = vsel %vm55, %v63, 0.0
      %68 = vadd.xlane.f32.xlu0 %v67
      %v69 = vpop.xlane.xlu0 %68
      %v70 = vmul.f32 %v58, 0.03125
      %v71 = vmul.f32 %v61, 0.03125
      %v72 = vmul.f32 %v66, 0.03125
      %v73 = vmul.f32 %v69, 0.03125
      %v74 = vmul.f32 %v70, %v70
      %v75 = vmul.f32 %v71, %v71
      %v76 = vsub.f32 %v72, %v74
      %v77 = vsub.f32 %v73, %v75
      %v78 = vsub.f32 %v53, %v70
      %v79 = vsub.f32 %v54, %v71
      %v80 = vadd.f32 %v76, 1e-05
      %v81 = vadd.f32 %v77, 1e-05
      %v82 = vrsqrt.pop %v80
      %v83 = vrsqrt.pop %v81
      %v84 = vmul.f32 %v78, %v82
      %v85 = vmul.f32 %v79, %v83
      %v86 = vld [vmem:[%s1] sm:$0x1]
      %v88 = vlaneseq
      %v89 = vshrl.u32 %v88, 7
      %v90 = vsub.s32 0, %v89
      %v91 = vrot.slane %v86, %v90
      %v93 = vmul.f32 %v84, %v91
      %v94 = vmul.f32 %v85, %v91
      %v95 = vld [vmem:[%s2] sm:$0x1]
      %v97 = vlaneseq
      %v98 = vshrl.u32 %v97, 7
      %v99 = vsub.s32 0, %v98
      %v100 = vrot.slane %v95, %v99
      %v102 = vadd.f32 %v93, %v100
      %v103 = vadd.f32 %v94, %v100
      %104 = vst.msk [vmem:[#allocation2] sm:$0xff] %vm55, %v102
      %105 = vst.msk [vmem:[#allocation2 + $0x8] sm:$0xff] %vm55, %v103
      %106 = vst [vmem:[#allocation3] sm:$0xff] 0.0
      %107 = vst [vmem:[#allocation3 + $0x8] sm:$0xff] 0.0
    $region33: #{tpu_custom_call.1} parent=1 // pred_fallthru
      _
    %v108 = vld [vmem:[#allocation3] sm:$0xff]
    %v109 = vld [vmem:[#allocation3 + $0x8] sm:$0xff]
    %s110 = smul.u32 0, 16
    %s111 = scalar_lea.vmem [#allocation2], %s110
    %v112 = vld [vmem:[%s111] sm:$0xff]
    %v113 = vld [vmem:[%s111 + $0x8] sm:$0xff]
    %v114 = vld [vmem:[#allocation7] sm:$0xff]
    %v115 = vld [vmem:[#allocation7 + $0x8] sm:$0xff]
    %v116 = vld [vmem:[#allocation7 + $0x10] sm:$0xff]
    %v117 = vld [vmem:[#allocation7 + $0x18] sm:$0xff]
    %vm118 = vcmask 261120
    %v120 = vsel %vm118, %v112, 0
    %v123 = vsel %vm118, %v113, 0
    %125 = vmatprep.subr.mxu0 0.0
    %126 = vmatpush1.msra.mxu0 %v114
    %127 = vmatprep.subr.mxu0 0.0
    %128 = vmatpush1.msra.mxu0 %v115
    %129 = vmatprep.subr.mxu0 0.0
    %130 = vmatpush1.msra.mxu0 %v116
    %131 = vmatprep.subr.mxu0 0.0
    %132 = vmatpush1.msra.mxu0 %v117
    %133 = vmatprep.subr.mxu0 0.0
    %134 = vmatpush1.msra.mxu0 0.0
    %135 = vmatprep.subr.mxu0 0.0
    %136 = vmatpush1.msra.mxu0 0.0
    %137 = vmatprep.subr.mxu0 0.0
    %138 = vmatpush1.msra.mxu0 0.0
    %139 = vmatprep.subr.mxu0 0.0
    %140 = vmatpush1.msra.mxu0 0.0
    %141 = vmatprep.subr.mxu0 0.0
    %142 = vmatpush1.msra.mxu0 0.0
    %143 = vmatprep.subr.mxu0 0.0
    %144 = vmatpush1.msra.mxu0 0.0
    %145 = vmatprep.subr.mxu0 0.0
    %146 = vmatpush1.msra.mxu0 0.0
    %147 = vmatprep.subr.mxu0 0.0
    %148 = vmatpush1.msra.mxu0 0.0
    %149 = vmatprep.subr.mxu0 0.0
    %150 = vmatpush1.msra.mxu0 0.0
    %151 = vmatprep.subr.mxu0 0.0
    %152 = vmatpush1.msra.mxu0 0.0
    %153 = vmatprep.subr.mxu0 0.0
    %154 = vmatpush1.msra.mxu0 0.0
    %155 = vmatprep.subr.mxu0 0.0
    %156 = vmatpush1.msra.mxu0 0.0
    %157 = vmatprep.subr.mxu0 0.0
    %158 = vmatpush1.msra.mxu0 0.0
    %159 = vmatprep.subr.mxu0 0.0
    %160 = vmatpush1.msra.mxu0 0.0
    %161 = vmatprep.subr.mxu0 0.0
    %162 = vmatpush1.msra.mxu0 0.0
    %163 = vmatprep.subr.mxu0 0.0
    %164 = vmatpush1.msra.mxu0 0.0
    %165 = vmatprep.subr.mxu0 0.0
    %166 = vmatpush1.msra.mxu0 0.0
    %167 = vmatprep.subr.mxu0 0.0
    %168 = vmatpush1.msra.mxu0 0.0
    %169 = vmatprep.subr.mxu0 0.0
    %170 = vmatpush1.msra.mxu0 0.0
    %171 = vmatprep.subr.mxu0 0.0
    %172 = vmatpush1.msra.mxu0 0.0
    %173 = vmatprep.subr.mxu0 0.0
    %174 = vmatpush1.msra.mxu0 0.0
    %175 = vmatprep.subr.mxu0 0.0
    %176 = vmatpush1.msra.mxu0 0.0
    %177 = vmatprep.subr.mxu0 0.0
    %178 = vmatpush1.msra.mxu0 0.0
    %179 = vmatprep.subr.mxu0 0.0
    %180 = vmatpush1.msra.mxu0 0.0
    %181 = vmatprep.subr.mxu0 0.0
    %182 = vmatpush1.msra.mxu0 0.0
    %183 = vmatprep.subr.mxu0 0.0
    %184 = vmatpush1.msra.mxu0 0.0
    %185 = vmatprep.subr.mxu0 0.0
    %186 = vmatpush1.msra.mxu0 0.0
    %187 = vmatprep.subr.mxu0 0.0
    %188 = vmatpush1.msra.mxu0 0.0
    %189 = vmatprep.mubr.f32.mxu0 0.0
    %190 = vmatmul.mubr.f32.gmra.mrb[0].mxu0 %v120
    %v191 = vpop.f32.mrb[0].mxu0
    %v192 = vadd.f32 0.0, %v191
    %v193 = vpop.f32.mrb[0].mxu0
    %194 = vmatprep.mubr.f32.mxu0 0.0
    %195 = vmatmul.mubr.f32.gmra.mrb[0].mxu0 %v123
    %v196 = vpop.f32.mrb[0].mxu0
    %v197 = vadd.f32 0.0, %v196
    %v198 = vpop.f32.mrb[0].mxu0
    %199 = vdwg.mxu0
    %v200 = vadd.f32 %v108, %v192
    %v201 = vadd.f32 %v109, %v197
    %202 = vst [vmem:[#allocation3] sm:$0xff] %v200
    %203 = vst [vmem:[#allocation3 + $0x8] sm:$0xff] %v201
    // Predicated region
    $region34: #{tpu_custom_call.1} parent=1 // pred_check
      %p204 = pneg %p49
    $region35: #{tpu_custom_call.1} parent=1 // pred_check_branch
      %206 = sbr.rel (%p204) target = $region37
    $region36: #{tpu_custom_call.1} parent=1 // pred_region
      %v207 = vld [vmem:[#allocation3] sm:$0xff]
      %v208 = vld [vmem:[#allocation3 + $0x8] sm:$0xff]
      %v209 = vld [vmem:[%s4] sm:$0x1]
      %v211 = vlaneseq
      %v212 = vshrl.u32 %v211, 7
      %v213 = vsub.s32 0, %v212
      %v214 = vrot.slane %v209, %v213
      %v216 = vadd.f32 %v207, %v214
      %v217 = vadd.f32 %v208, %v214
      %218 = vst [vmem:[#allocation9] sm:$0xff] %v216
      %219 = vst [vmem:[#allocation9 + $0x8] sm:$0xff] %v217
    $region37: #{tpu_custom_call.1} parent=1 // pred_fallthru
      _
    // Predicated region
    $region38: #{tpu_custom_call.1} parent=1 // pred_check
      _
    $region39: #{tpu_custom_call.1} parent=1 // pred_check_branch
      %221 = sbr.rel (0) target = $region41
    $region40: #{tpu_custom_call.1} parent=1 // pred_region
      %s223 = ssub.s32 256, 256
      %224 = vsyncadd [#allocation6], %s223
      %s225 = sshll.u32 [#allocation9], 4
      %s226 = int_to_ptr.vmem [resolvable:$true] %s225
      %231 = dma.vmem_to_hbm [thread:$0]  %s226, 256, %s5, [#allocation6], 128, 128, 8
    $region41: #{tpu_custom_call.1} parent=1 // pred_fallthru
      _
    // Predicated region
    $region42: #{tpu_custom_call.1} parent=1 // pred_check
      _
    $region43: #{tpu_custom_call.1} parent=1 // pred_check_branch
      %233 = sbr.rel (0) target = $region45
    $region44: #{tpu_custom_call.1} parent=1 // pred_region
      %234 = dma.done [#allocation6], 256
    $region45: #{tpu_custom_call.1} parent=1 // pred_fallthru
      _
    %235 = vsyncpa [#allocation5], 1
    %236 = vsyncpa [#allocation8], 1
    %237 = vsyncpa [#allocation6], 1

</llo_original>
